<compile_context>
chip_gen: v7x
topology: tpu7x:2x2x1
jax: 0.10.0
libtpu: 0.0.40
codegen_flags: <defaults>
</compile_context>

<pallas_src>
import jax
import jax.numpy as jnp
from jax import lax
from jax.experimental import pallas as pl
from jax.experimental.pallas import tpu as pltpu


def _policy_kernel(x_ref, p8_ref, wh_ref, probs_ref, value_ref):
    """Fused actor-critic forward for one batch tile.

    x_ref     : (tb, 4)    f32  input states
    p8_ref    : (8, 128)   f32  rows 0:3 = affine1 weight (input-feature major),
                                row 4 = affine1 bias,
                                row 5 = fused head bias (lanes 0:1 action, lane 2 value)
    wh_ref    : (128, 128) f32  cols 0:1 = action head W^T, col 2 = value head W^T, rest 0
    probs_ref : (tb, 2)    f32  softmax action probabilities
    value_ref : (tb, 1)    f32  state value
    """
    x = x_ref[...]                                              # (tb, 4)
    p8 = p8_ref[...]                                            # (8, 128)

    # affine1 + ReLU: K=4 is far too small for the MXU -> 4 VPU broadcast MACs.
    h = x[:, 0:1] * p8[0:1, :] + p8[4:5, :]
    h = h + x[:, 1:2] * p8[1:2, :]
    h = h + x[:, 2:3] * p8[2:3, :]
    h = h + x[:, 3:4] * p8[3:4, :]
    h = jnp.maximum(h, 0.0)                                     # (tb, 128)

    # Both heads in a single MXU matmul + fused bias row.
    z = jnp.dot(h, wh_ref[...], preferred_element_type=jnp.float32) + p8[5:6, :]

    # Exact 2-class softmax (sigmoid closed form) -- no reductions, no
    # approximate reciprocal, probabilities sum to 1 exactly.
    z0 = z[:, 0:1]
    z1 = z[:, 1:2]
    p0 = 1.0 / (1.0 + jnp.exp(z1 - z0))                         # (tb, 1)

    lane = lax.broadcasted_iota(jnp.int32, (z.shape[0], 2), 1)
    probs_ref[...] = jnp.where(lane == 0, p0, 1.0 - p0)         # (tb, 2)
    value_ref[...] = z[:, 2:3]                                  # (tb, 1)


def pack_params(params):
    """Pack PyTorch-layout params into the 2 kernel operands (done once)."""
    w1, b1, w2, b2, w3, b3 = params
    # w1 (128,4), b1 (128,), w2 (2,128), b2 (2,), w3 (1,128), b3 (1,)
    p8 = jnp.zeros((8, 128), jnp.float32)
    p8 = p8.at[0:4, :].set(w1.T)            # affine1 weight, input-feature major
    p8 = p8.at[4, :].set(b1)                # affine1 bias
    p8 = p8.at[5, 0:2].set(b2)              # action head bias
    p8 = p8.at[5, 2].set(b3[0])             # value head bias

    w_heads = jnp.zeros((128, 128), jnp.float32)
    w_heads = w_heads.at[:, 0:2].set(w2.T)  # action head
    w_heads = w_heads.at[:, 2].set(w3[0])   # value head
    return p8, w_heads


def policy_forward(x, packed, *, block_b=4096):
    """x: (B, 4) float32.  Returns (action_prob (B, 2), state_values (B, 1))."""
    p8, w_heads = packed
    B = x.shape[0]

    if B <= 512:
        # Tiny / dispatch-bound regime: one full-extent block, single grid step.
        tb = B
    else:
        # >= 2 batch tiles (both v7x TensorCores get work via "parallel"),
        # capped at block_b so the x block + f32 temporaries stay well inside
        # VMEM (v7x: 64 MiB physical / 32 MiB scoped default).
        tb = min(block_b, 8 * pl.cdiv(pl.cdiv(B, 2), 8))
    b_pad = pl.cdiv(B, tb) * tb
    if b_pad != B:
        x = jnp.pad(x, ((0, b_pad - B), (0, 0)))

    probs, values = pl.pallas_call(
        _policy_kernel,
        out_shape=(
            jax.ShapeDtypeStruct((b_pad, 2), jnp.float32),
            jax.ShapeDtypeStruct((b_pad, 1), jnp.float32),
        ),
        grid=(b_pad // tb,),
        in_specs=[
            pl.BlockSpec((tb, 4), lambda i: (i, 0)),
            pl.BlockSpec((8, 128), lambda i: (0, 0)),
            pl.BlockSpec((128, 128), lambda i: (0, 0)),
        ],
        out_specs=(
            pl.BlockSpec((tb, 2), lambda i: (i, 0)),
            pl.BlockSpec((tb, 1), lambda i: (i, 0)),
        ),
        compiler_params=pltpu.CompilerParams(
            dimension_semantics=("parallel",)),   # batch tiles across TCs (v7x)
    )(x, p8, w_heads)

    # Padded rows (if any) are computed as finite garbage and sliced off here.
    return probs[:B], values[:B]


def init_params(key):
    """PyTorch nn.Linear default init: U(-k, k) with k = 1/sqrt(fan_in)."""
    ks = jax.random.split(key, 6)

    def uniform(k, shape, fan_in):
        bound = 1.0 / jnp.sqrt(jnp.float32(fan_in))
        return jax.random.uniform(k, shape, jnp.float32, -bound, bound)

    w1 = uniform(ks[0], (128, 4), 4)
    b1 = uniform(ks[1], (128,), 4)
    w2 = uniform(ks[2], (2, 128), 128)
    b2 = uniform(ks[3], (2,), 128)
    w3 = uniform(ks[4], (1, 128), 128)
    b3 = uniform(ks[5], (1,), 128)
    return (w1, b1, w2, b2, w3, b3)


if __name__ == "__main__":
    key = jax.random.PRNGKey(0)
    pkey, xkey = jax.random.split(key)

    params = init_params(pkey)
    packed = pack_params(params)   # one-time weight packing, reused across calls

    w1, b1, w2, b2, w3, b3 = params

    def ref_forward(xx):
        # Pure-JAX reference of the PyTorch forward semantics (high precision).
        hp = jnp.maximum(
            jnp.dot(xx, w1.T, precision=lax.Precision.HIGHEST) + b1, 0.0)
        logits = jnp.dot(hp, w2.T, precision=lax.Precision.HIGHEST) + b2
        vals = jnp.dot(hp, w3.T, precision=lax.Precision.HIGHEST) + b3
        return jax.nn.softmax(logits, axis=-1), vals

    # CartPole state has 4 features; small batch of 2 env states.
    x = jax.random.normal(xkey, (2, 4), jnp.float32)
    action_prob, state_values = policy_forward(x, packed)
    jax.block_until_ready((action_prob, state_values))

    prob_ref, val_ref = ref_forward(x)
    assert action_prob.shape == (2, 2) and state_values.shape == (2, 1)
    assert jnp.allclose(action_prob, prob_ref, atol=1e-4)
    assert jnp.allclose(jnp.sum(action_prob, axis=-1), 1.0, atol=1e-6)
    assert jnp.allclose(state_values, val_ref, atol=1e-4)

    # Also exercise the multi-tile (grid > 1) + batch-padding path.
    xb = jax.random.normal(jax.random.PRNGKey(1), (2001, 4), jnp.float32)
    pb, vb = policy_forward(xb, packed)
    jax.block_until_ready((pb, vb))
    prob_ref_b, val_ref_b = ref_forward(xb)
    assert pb.shape == (2001, 2) and vb.shape == (2001, 1)
    assert jnp.allclose(pb, prob_ref_b, atol=2e-4)
    assert jnp.allclose(jnp.sum(pb, axis=-1), 1.0, atol=1e-6)
    assert jnp.allclose(vb, val_ref_b, atol=5e-4)

    print("KERNEL_OK")
</pallas_src>

<mosaic_0001>
module attributes {stable_mosaic.version = 11 : i64} {
  func.func @_policy_kernel(%arg0: i32, %arg1: memref<2x4xf32, #tpu.memory_space<vmem>>, %arg2: memref<8x128xf32, #tpu.memory_space<vmem>>, %arg3: memref<128x128xf32, #tpu.memory_space<vmem>>, %arg4: memref<2x2xf32, #tpu.memory_space<vmem>>, %arg5: memref<2x1xf32, #tpu.memory_space<vmem>>) attributes {dimension_semantics = [#tpu.dimension_semantics<parallel>], iteration_bounds = array<i64: 1>, scalar_prefetch = 0 : i64, scratch_operands = 0 : i64, tpu.core_type = #tpu.core_type<tc>, window_params = [{transform_indices = @transform_0, window_bounds = array<i64: 2, 4>}, {pipeline_mode = #tpu.pipeline_mode<synchronous>, transform_indices = @transform_1, window_bounds = array<i64: 8, 128>}, {pipeline_mode = #tpu.pipeline_mode<synchronous>, transform_indices = @transform_2, window_bounds = array<i64: 128, 128>}, {transform_indices = @transform_3, window_bounds = array<i64: 2, 2>}, {transform_indices = @transform_4, window_bounds = array<i64: 2, 1>}]} {
    %c0 = arith.constant 0 : index
    %c0_0 = arith.constant 0 : index
    %0 = vector.load %arg1[%c0, %c0_0] : memref<2x4xf32, #tpu.memory_space<vmem>>, vector<2x4xf32>
    %c0_1 = arith.constant 0 : index
    %c0_2 = arith.constant 0 : index
    %1 = vector.load %arg2[%c0_1, %c0_2] : memref<8x128xf32, #tpu.memory_space<vmem>>, vector<8x128xf32>
    %2 = vector.extract_strided_slice %0 {offsets = [0, 0], sizes = [2, 1], strides = [1, 1]} : vector<2x4xf32> to vector<2x1xf32>
    %3 = vector.extract_strided_slice %1 {offsets = [0, 0], sizes = [1, 128], strides = [1, 1]} : vector<8x128xf32> to vector<1x128xf32>
    %4 = vector.broadcast %2 : vector<2x1xf32> to vector<2x128xf32>
    %5 = vector.broadcast %3 : vector<1x128xf32> to vector<2x128xf32>
    %6 = arith.mulf %4, %5 : vector<2x128xf32>
    %7 = vector.extract_strided_slice %1 {offsets = [4, 0], sizes = [1, 128], strides = [1, 1]} : vector<8x128xf32> to vector<1x128xf32>
    %8 = vector.broadcast %7 : vector<1x128xf32> to vector<2x128xf32>
    %9 = arith.addf %6, %8 : vector<2x128xf32>
    %10 = vector.extract_strided_slice %0 {offsets = [0, 1], sizes = [2, 1], strides = [1, 1]} : vector<2x4xf32> to vector<2x1xf32>
    %11 = vector.extract_strided_slice %1 {offsets = [1, 0], sizes = [1, 128], strides = [1, 1]} : vector<8x128xf32> to vector<1x128xf32>
    %12 = vector.broadcast %10 : vector<2x1xf32> to vector<2x128xf32>
    %13 = vector.broadcast %11 : vector<1x128xf32> to vector<2x128xf32>
    %14 = arith.mulf %12, %13 : vector<2x128xf32>
    %15 = arith.addf %9, %14 : vector<2x128xf32>
    %16 = vector.extract_strided_slice %0 {offsets = [0, 2], sizes = [2, 1], strides = [1, 1]} : vector<2x4xf32> to vector<2x1xf32>
    %17 = vector.extract_strided_slice %1 {offsets = [2, 0], sizes = [1, 128], strides = [1, 1]} : vector<8x128xf32> to vector<1x128xf32>
    %18 = vector.broadcast %16 : vector<2x1xf32> to vector<2x128xf32>
    %19 = vector.broadcast %17 : vector<1x128xf32> to vector<2x128xf32>
    %20 = arith.mulf %18, %19 : vector<2x128xf32>
    %21 = arith.addf %15, %20 : vector<2x128xf32>
    %22 = vector.extract_strided_slice %0 {offsets = [0, 3], sizes = [2, 1], strides = [1, 1]} : vector<2x4xf32> to vector<2x1xf32>
    %23 = vector.extract_strided_slice %1 {offsets = [3, 0], sizes = [1, 128], strides = [1, 1]} : vector<8x128xf32> to vector<1x128xf32>
    %24 = vector.broadcast %22 : vector<2x1xf32> to vector<2x128xf32>
    %25 = vector.broadcast %23 : vector<1x128xf32> to vector<2x128xf32>
    %26 = arith.mulf %24, %25 : vector<2x128xf32>
    %27 = arith.addf %21, %26 : vector<2x128xf32>
    %cst = arith.constant 0.000000e+00 : f32
    %28 = vector.broadcast %cst : f32 to vector<2x128xf32>
    %29 = arith.maximumf %27, %28 : vector<2x128xf32>
    %c0_3 = arith.constant 0 : index
    %c0_4 = arith.constant 0 : index
    %30 = vector.load %arg3[%c0_3, %c0_4] : memref<128x128xf32, #tpu.memory_space<vmem>>, vector<128x128xf32>
    %cst_5 = arith.constant dense<0.000000e+00> : vector<2x128xf32>
    %31 = tpu.matmul %29, %30, %cst_5 {dimension_numbers = #tpu.dot_dimension_numbers<[1], [0], [0], [1], [0, 0, 1, 1], [], []>} : vector<2x128xf32>, vector<128x128xf32>, vector<2x128xf32> -> vector<2x128xf32>
    %32 = vector.extract_strided_slice %1 {offsets = [5, 0], sizes = [1, 128], strides = [1, 1]} : vector<8x128xf32> to vector<1x128xf32>
    %33 = vector.broadcast %32 : vector<1x128xf32> to vector<2x128xf32>
    %34 = arith.addf %31, %33 : vector<2x128xf32>
    %35 = vector.extract_strided_slice %34 {offsets = [0, 0], sizes = [2, 1], strides = [1, 1]} : vector<2x128xf32> to vector<2x1xf32>
    %36 = vector.extract_strided_slice %34 {offsets = [0, 1], sizes = [2, 1], strides = [1, 1]} : vector<2x128xf32> to vector<2x1xf32>
    %37 = arith.subf %36, %35 : vector<2x1xf32>
    %38 = math.exp %37 : vector<2x1xf32>
    %cst_6 = arith.constant 1.000000e+00 : f32
    %39 = vector.broadcast %cst_6 : f32 to vector<2x1xf32>
    %40 = arith.addf %39, %38 : vector<2x1xf32>
    %cst_7 = arith.constant 1.000000e+00 : f32
    %41 = vector.broadcast %cst_7 : f32 to vector<2x1xf32>
    %42 = arith.divf %41, %40 : vector<2x1xf32>
    %43 = tpu.iota {dimensions = array<i32: 1>} : vector<2x2xi32>
    %c0_i32 = arith.constant 0 : i32
    %44 = vector.broadcast %c0_i32 : i32 to vector<2x2xi32>
    %45 = arith.cmpi eq, %43, %44 : vector<2x2xi32>
    %cst_8 = arith.constant 1.000000e+00 : f32
    %46 = vector.broadcast %cst_8 : f32 to vector<2x1xf32>
    %47 = arith.subf %46, %42 : vector<2x1xf32>
    %48 = vector.shape_cast %42 : vector<2x1xf32> to vector<2x1xf32>
    %49 = vector.broadcast %48 : vector<2x1xf32> to vector<2x2xf32>
    %50 = vector.shape_cast %47 : vector<2x1xf32> to vector<2x1xf32>
    %51 = vector.broadcast %50 : vector<2x1xf32> to vector<2x2xf32>
    %52 = arith.select %45, %49, %51 : vector<2x2xi1>, vector<2x2xf32>
    %c0_9 = arith.constant 0 : index
    %c0_10 = arith.constant 0 : index
    %53 = vector.load %arg4[%c0_9, %c0_10] : memref<2x2xf32, #tpu.memory_space<vmem>>, vector<2x2xf32>
    tpu.vector_store %arg4[%c0_9, %c0_10], %52 {strides = array<i32>} : memref<2x2xf32, #tpu.memory_space<vmem>>, vector<2x2xf32>,
    %54 = vector.extract_strided_slice %34 {offsets = [0, 2], sizes = [2, 1], strides = [1, 1]} : vector<2x128xf32> to vector<2x1xf32>
    %c0_11 = arith.constant 0 : index
    %c0_12 = arith.constant 0 : index
    %55 = vector.load %arg5[%c0_11, %c0_12] : memref<2x1xf32, #tpu.memory_space<vmem>>, vector<2x1xf32>
    tpu.vector_store %arg5[%c0_11, %c0_12], %54 {strides = array<i32>} : memref<2x1xf32, #tpu.memory_space<vmem>>, vector<2x1xf32>,
    return
  }
  func.func @transform_0(%arg0: i32) -> (i32, i32) {
    %c0_i32 = arith.constant 0 : i32
    %c0_i32_0 = arith.constant 0 : i32
    return %arg0, %c0_i32 : i32, i32
  }
  func.func @transform_1(%arg0: i32) -> (i32, i32) {
    %c0_i32 = arith.constant 0 : i32
    %c0_i32_0 = arith.constant 0 : i32
    %c0_i32_1 = arith.constant 0 : i32
    return %c0_i32, %c0_i32_0 : i32, i32
  }
  func.func @transform_2(%arg0: i32) -> (i32, i32) {
    %c0_i32 = arith.constant 0 : i32
    %c0_i32_0 = arith.constant 0 : i32
    %c0_i32_1 = arith.constant 0 : i32
    return %c0_i32, %c0_i32_0 : i32, i32
  }
  func.func @transform_3(%arg0: i32) -> (i32, i32) {
    %c0_i32 = arith.constant 0 : i32
    %c0_i32_0 = arith.constant 0 : i32
    return %arg0, %c0_i32 : i32, i32
  }
  func.func @transform_4(%arg0: i32) -> (i32, i32) {
    %c0_i32 = arith.constant 0 : i32
    %c0_i32_0 = arith.constant 0 : i32
    return %arg0, %c0_i32 : i32, i32
  }
}

</mosaic_0001>

<llo_original>
// kernel: tpu_custom_call.1
$region0: #{tpu_custom_call.1}
  #allocation0 [shape = 'u32[]', space=smem, size = 0x4, offset = 0x4, fixed_abs, tag = 'smem constant byte address 0x4 - core index']
  #allocation1 [shape = 'u32[144,128]{1,0:T(1,128)}', space=vmem, size = 0x12000, scoped, tag = 'internal scratch']
  %s0 = inlined_call_operand.hbm [shape: f32[2,4], index: 0, kind: input, shape index: {}]
  %s1 = inlined_call_operand.hbm [shape: f32[8,128], index: 1, kind: input, shape index: {}]
  %s2 = inlined_call_operand.hbm [shape: f32[128,128], index: 2, kind: input, shape index: {}]
  %s3 = inlined_call_operand.hbm [shape: f32[2,2], index: 3, kind: output, shape index: {0}]
  %s4 = inlined_call_operand.vmem [shape: f32[2,1], index: 4, kind: output, shape index: {1}]
  %5 = xla_tuple %s3, %s4
  %s6 = sld [smem:[#allocation0]]
  $region42: #{tpu_custom_call.1} parent=0
    _
  %s8 = ssub.s32 1, %s6
  %s9 = scalar_select 0, %s8, %s6
  $region1: #{tpu_custom_call.1} parent=0
    #allocation2 [shape = 'u8[1024]{0}', space=vmem, size = 0x400, scoped, tag = 'input window, operand 0, single buffered']
    #allocation3 [shape = 's32[1]{0}', space=sflag, size = 0x4, scoped, tag = 'scoped memory for tpu_custom_call.1']
    #allocation4 [shape = 's32[1]{0}', space=sflag, size = 0x4, scoped, tag = 'scoped memory for tpu_custom_call.1']
    #allocation5 [shape = 'u8[4096]{0}', space=vmem, size = 0x1000, scoped, tag = 'input window, operand 1, single buffered']
    #allocation6 [shape = 's32[1]{0}', space=sflag, size = 0x4, scoped, tag = 'scoped memory for tpu_custom_call.1']
    #allocation7 [shape = 'u8[65536]{0}', space=vmem, size = 0x10000, scoped, tag = 'input window, operand 2, single buffered']
    #allocation8 [shape = 'u8[1024]{0}', space=vmem, size = 0x400, scoped, tag = 'output window, operand 0, single buffered']
    %10 = vsyncpa [#allocation3], 0
    %11 = vsyncpa [#allocation6], 0
    %12 = vsyncpa [#allocation4], 0
    // Predicated region
    $region2: #{tpu_custom_call.1} parent=1 // pred_check
      _
    $region3: #{tpu_custom_call.1} parent=1 // pred_check_branch
      %14 = sbr.rel (0) target = $region5
    $region4: #{tpu_custom_call.1} parent=1 // pred_region
      %s16 = ssub.s32 32, 32
      %17 = vsyncadd [#allocation3], %s16
      %s19 = sshll.u32 [#allocation2], 4
      %s20 = int_to_ptr.vmem [resolvable:$true] %s19
      %22 = dma.hbm_to_vmem [thread:$0]  %s0, 32, %s20, [#allocation3]
    $region5: #{tpu_custom_call.1} parent=1 // pred_fallthru
      _
    // Predicated region
    $region6: #{tpu_custom_call.1} parent=1 // pred_check
      _
    $region7: #{tpu_custom_call.1} parent=1 // pred_check_branch
      %24 = sbr.rel (0) target = $region9
    $region8: #{tpu_custom_call.1} parent=1 // pred_region
      %s26 = ssub.s32 128, 128
      %27 = vsyncadd [#allocation6], %s26
      %s29 = sshll.u32 [#allocation5], 4
      %s30 = int_to_ptr.vmem [resolvable:$true] %s29
      %32 = dma.hbm_to_vmem [thread:$0]  %s1, 128, %s30, [#allocation6]
    $region9: #{tpu_custom_call.1} parent=1 // pred_fallthru
      _
    // Predicated region
    $region10: #{tpu_custom_call.1} parent=1 // pred_check
      _
    $region11: #{tpu_custom_call.1} parent=1 // pred_check_branch
      %34 = sbr.rel (0) target = $region13
    $region12: #{tpu_custom_call.1} parent=1 // pred_region
      %s36 = ssub.s32 2048, 2048
      %37 = vsyncadd [#allocation6], %s36
      %s38 = sshll.u32 [#allocation7], 4
      %s39 = int_to_ptr.vmem [resolvable:$true] %s38
      %44 = dma.hbm_to_vmem [thread:$0]  %s2, 2048, %s39, [#allocation6], 128, 128, 8
    $region13: #{tpu_custom_call.1} parent=1 // pred_fallthru
      _
    // Predicated region
    $region14: #{tpu_custom_call.1} parent=1 // pred_check
      _
    $region15: #{tpu_custom_call.1} parent=1 // pred_check_branch
      %46 = sbr.rel (0) target = $region17
    $region16: #{tpu_custom_call.1} parent=1 // pred_region
      %47 = dma.done [#allocation3], 32
    $region17: #{tpu_custom_call.1} parent=1 // pred_fallthru
      _
    // Predicated region
    $region18: #{tpu_custom_call.1} parent=1 // pred_check
      _
    $region19: #{tpu_custom_call.1} parent=1 // pred_check_branch
      %49 = sbr.rel (0) target = $region21
    $region20: #{tpu_custom_call.1} parent=1 // pred_region
      %50 = dma.done [#allocation6], 128
    $region21: #{tpu_custom_call.1} parent=1 // pred_fallthru
      _
    // Predicated region
    $region22: #{tpu_custom_call.1} parent=1 // pred_check
      _
    $region23: #{tpu_custom_call.1} parent=1 // pred_check_branch
      %52 = sbr.rel (0) target = $region25
    $region24: #{tpu_custom_call.1} parent=1 // pred_region
      %53 = dma.done [#allocation6], 2048
    $region25: #{tpu_custom_call.1} parent=1 // pred_fallthru
      _
    %v54 = vld [vmem:[#allocation2] sm:$0x3]
    %v55 = vld [vmem:[#allocation5] sm:$0xff]
    %57 = vset.pattern.permute.xlu0 0
    %58 = vperm.xlu0 %57, %v54
    %v59 = vpop.permute.xlu0 %58
    %v61 = vlaneseq
    %v62 = vshrl.u32 %v61, 7
    %v63 = vsub.s32 0, %v62
    %v64 = vrot.slane %v55, %v63
    %v65 = vmul.f32 %v59, %v64
    %v66 = vlaneseq
    %v67 = vshrl.u32 %v66, 7
    %v68 = vsub.s32 4, %v67
    %v69 = vrot.slane %v55, %v68
    %v70 = vadd.f32 %v65, %v69
    %71 = vset.pattern.permute.xlu0 1
    %72 = vperm.xlu0 %71, %v54
    %v73 = vpop.permute.xlu0 %72
    %v75 = vlaneseq
    %v76 = vshrl.u32 %v75, 7
    %v77 = vsub.s32 1, %v76
    %v78 = vrot.slane %v55, %v77
    %v79 = vmul.f32 %v73, %v78
    %v80 = vadd.f32 %v70, %v79
    %81 = vset.pattern.permute.xlu0 2
    %82 = vperm.xlu0 %81, %v54
    %v83 = vpop.permute.xlu0 %82
    %v85 = vlaneseq
    %v86 = vshrl.u32 %v85, 7
    %v87 = vsub.s32 2, %v86
    %v88 = vrot.slane %v55, %v87
    %v89 = vmul.f32 %v83, %v88
    %v90 = vadd.f32 %v80, %v89
    %91 = vset.pattern.permute.xlu0 3
    %92 = vperm.xlu0 %91, %v54
    %v93 = vpop.permute.xlu0 %92
    %v95 = vlaneseq
    %v96 = vshrl.u32 %v95, 7
    %v97 = vsub.s32 3, %v96
    %v98 = vrot.slane %v55, %v97
    %v99 = vmul.f32 %v93, %v98
    %v100 = vadd.f32 %v90, %v99
    %v101 = vmax.f32 %v100, 0.0
    %v102 = vld [vmem:[#allocation7] sm:$0xff]
    %v103 = vld [vmem:[#allocation7 + $0x8] sm:$0xff]
    %v104 = vld [vmem:[#allocation7 + $0x10] sm:$0xff]
    %v105 = vld [vmem:[#allocation7 + $0x18] sm:$0xff]
    %v106 = vld [vmem:[#allocation7 + $0x20] sm:$0xff]
    %v107 = vld [vmem:[#allocation7 + $0x28] sm:$0xff]
    %v108 = vld [vmem:[#allocation7 + $0x30] sm:$0xff]
    %v109 = vld [vmem:[#allocation7 + $0x38] sm:$0xff]
    %v110 = vld [vmem:[#allocation7 + $0x40] sm:$0xff]
    %v111 = vld [vmem:[#allocation7 + $0x48] sm:$0xff]
    %v112 = vld [vmem:[#allocation7 + $0x50] sm:$0xff]
    %v113 = vld [vmem:[#allocation7 + $0x58] sm:$0xff]
    %v114 = vld [vmem:[#allocation7 + $0x60] sm:$0xff]
    %v115 = vld [vmem:[#allocation7 + $0x68] sm:$0xff]
    %v116 = vld [vmem:[#allocation7 + $0x70] sm:$0xff]
    %v117 = vld [vmem:[#allocation7 + $0x78] sm:$0xff]
    %v118 = vlaneseq
    %v119 = vshrl.u32 %v118, 7
    %v120 = vsub.s32 5, %v119
    %v121 = vrot.slane %v55, %v120
    %122 = vmatprep.subr.mxu0 0.0
    %123 = vmatpush1.msra.mxu0 %v102
    %124 = vmatprep.subr.mxu0 0.0
    %125 = vmatpush1.msra.mxu0 %v103
    %126 = vmatprep.subr.mxu0 0.0
    %127 = vmatpush1.msra.mxu0 %v104
    %128 = vmatprep.subr.mxu0 0.0
    %129 = vmatpush1.msra.mxu0 %v105
    %130 = vmatprep.subr.mxu0 0.0
    %131 = vmatpush1.msra.mxu0 %v106
    %132 = vmatprep.subr.mxu0 0.0
    %133 = vmatpush1.msra.mxu0 %v107
    %134 = vmatprep.subr.mxu0 0.0
    %135 = vmatpush1.msra.mxu0 %v108
    %136 = vmatprep.subr.mxu0 0.0
    %137 = vmatpush1.msra.mxu0 %v109
    %138 = vmatprep.subr.mxu0 0.0
    %139 = vmatpush1.msra.mxu0 %v110
    %140 = vmatprep.subr.mxu0 0.0
    %141 = vmatpush1.msra.mxu0 %v111
    %142 = vmatprep.subr.mxu0 0.0
    %143 = vmatpush1.msra.mxu0 %v112
    %144 = vmatprep.subr.mxu0 0.0
    %145 = vmatpush1.msra.mxu0 %v113
    %146 = vmatprep.subr.mxu0 0.0
    %147 = vmatpush1.msra.mxu0 %v114
    %148 = vmatprep.subr.mxu0 0.0
    %149 = vmatpush1.msra.mxu0 %v115
    %150 = vmatprep.subr.mxu0 0.0
    %151 = vmatpush1.msra.mxu0 %v116
    %152 = vmatprep.subr.mxu0 0.0
    %153 = vmatpush1.msra.mxu0 %v117
    %154 = vmatprep.subr.mxu0 0.0
    %155 = vmatpush1.msra.mxu0 0.0
    %156 = vmatprep.subr.mxu0 0.0
    %157 = vmatpush1.msra.mxu0 0.0
    %158 = vmatprep.subr.mxu0 0.0
    %159 = vmatpush1.msra.mxu0 0.0
    %160 = vmatprep.subr.mxu0 0.0
    %161 = vmatpush1.msra.mxu0 0.0
    %162 = vmatprep.subr.mxu0 0.0
    %163 = vmatpush1.msra.mxu0 0.0
    %164 = vmatprep.subr.mxu0 0.0
    %165 = vmatpush1.msra.mxu0 0.0
    %166 = vmatprep.subr.mxu0 0.0
    %167 = vmatpush1.msra.mxu0 0.0
    %168 = vmatprep.subr.mxu0 0.0
    %169 = vmatpush1.msra.mxu0 0.0
    %170 = vmatprep.subr.mxu0 0.0
    %171 = vmatpush1.msra.mxu0 0.0
    %172 = vmatprep.subr.mxu0 0.0
    %173 = vmatpush1.msra.mxu0 0.0
    %174 = vmatprep.subr.mxu0 0.0
    %175 = vmatpush1.msra.mxu0 0.0
    %176 = vmatprep.subr.mxu0 0.0
    %177 = vmatpush1.msra.mxu0 0.0
    %178 = vmatprep.subr.mxu0 0.0
    %179 = vmatpush1.msra.mxu0 0.0
    %180 = vmatprep.subr.mxu0 0.0
    %181 = vmatpush1.msra.mxu0 0.0
    %182 = vmatprep.subr.mxu0 0.0
    %183 = vmatpush1.msra.mxu0 0.0
    %184 = vmatprep.subr.mxu0 0.0
    %185 = vmatpush1.msra.mxu0 0.0
    %186 = vmatprep.mubr.f32.mxu0 0.0
    %187 = vmatmul.mubr.f32.gmra.mrb[0].mxu0 %v101
    %v188 = vpop.f32.mrb[0].mxu0
    %v189 = vadd.f32 %v121, %v188
    %v190 = vpop.f32.mrb[0].mxu0
    %191 = vdwg.mxu0
    %193 = vrot.lane.b32.xlu0 %v189, 1
    %v194 = vpop.permute.xlu0 %193
    %v196 = vsub.f32 %v189, %v194
    %v197 = vmul.f32 %v196, 1.442695
    %v198 = vpow.pop %v197
    %v199 = vadd.f32 %v198, 1.0
    %v200 = vrcp.pop %v199
    %v201 = vmul.f32 1.0, %v200
    %v202 = vlaneseq
    %v203 = vand.u32 %v202, 127
    %vm204 = vcmp.eq.s32.totalorder %v203, 0
    %v205 = vsub.f32 1.0, %v201
    %207 = vset.pattern.permute.xlu0 1
    %208 = vperm.xlu0 %207, %v201
    %v209 = vpop.permute.xlu0 %208
    %212 = vset.pattern.permute.xlu0 1
    %213 = vperm.xlu0 %212, %v205
    %v214 = vpop.permute.xlu0 %213
    %v216 = vsel %vm204, %v209, %v214
    %vm217 = vcmask 9216
    %218 = vst.msk [vmem:[#allocation8] sm:$0x3] %vm217, %v216
    %219 = vrot.lane.b32.xlu0 %v189, 126
    %v220 = vpop.permute.xlu0 %219
    %vm222 = vcmask 1024
    %223 = vst.msk [vmem:[%s4] sm:$0x3] %vm222, %v220
    // Predicated region
    $region26: #{tpu_custom_call.1} parent=1 // pred_check
      _
    $region27: #{tpu_custom_call.1} parent=1 // pred_check_branch
      %225 = sbr.rel (0) target = $region29
    $region28: #{tpu_custom_call.1} parent=1 // pred_region
      %s227 = ssub.s32 32, 32
      %228 = vsyncadd [#allocation4], %s227
      %s230 = sshll.u32 [#allocation8], 4
      %s231 = int_to_ptr.vmem [resolvable:$true] %s230
      %233 = dma.vmem_to_hbm [thread:$0]  %s231, 32, %s3, [#allocation4]
    $region29: #{tpu_custom_call.1} parent=1 // pred_fallthru
      _
    // Predicated region
    $region30: #{tpu_custom_call.1} parent=1 // pred_check
      _
    $region31: #{tpu_custom_call.1} parent=1 // pred_check_branch
      %235 = sbr.rel (0) target = $region33
    $region32: #{tpu_custom_call.1} parent=1 // pred_region
      _
    $region33: #{tpu_custom_call.1} parent=1 // pred_fallthru
      _
    // Predicated region
    $region34: #{tpu_custom_call.1} parent=1 // pred_check
      _
    $region35: #{tpu_custom_call.1} parent=1 // pred_check_branch
      %237 = sbr.rel (0) target = $region37
    $region36: #{tpu_custom_call.1} parent=1 // pred_region
      %238 = dma.done [#allocation4], 32
    $region37: #{tpu_custom_call.1} parent=1 // pred_fallthru
      _
    // Predicated region
    $region38: #{tpu_custom_call.1} parent=1 // pred_check
      _
    $region39: #{tpu_custom_call.1} parent=1 // pred_check_branch
      %240 = sbr.rel (0) target = $region41
    $region40: #{tpu_custom_call.1} parent=1 // pred_region
      _
    $region41: #{tpu_custom_call.1} parent=1 // pred_fallthru
      _
    %241 = vsyncpa [#allocation3], 1
    %242 = vsyncpa [#allocation6], 1
    %243 = vsyncpa [#allocation4], 1

</llo_original>
